<compile_context>
chip_gen: v6e
topology: v6e:2x2x1
jax: 0.10.0
libtpu: 0.0.40
codegen_flags: <defaults>
</compile_context>

<pallas_src>
import functools

import jax
import jax.numpy as jnp
from jax import lax
from jax.experimental import pallas as pl
from jax.experimental.pallas import tpu as pltpu


def _tv_kernel(x_ref, o_ref, acc_h_ref, acc_w_ref, carry_ref):
    h_idx = pl.program_id(1)
    n_h = pl.num_programs(1)
    C, TH, W = x_ref.shape  # batch dim is squeezed out of the block

    @pl.when(h_idx == 0)
    def _():
        acc_h_ref[...] = jnp.zeros_like(acc_h_ref)
        acc_w_ref[...] = jnp.zeros_like(acc_w_ref)

    x = x_ref[...]                                            # (C, TH, W), input dtype

    # Differences in the input dtype; promote to f32 only for square/accumulate.
    dh = (x[:, 1:, :] - x[:, :-1, :]).astype(jnp.float32)     # (C, TH-1, W)
    dw = (x[:, :, 1:] - x[:, :, :-1]).astype(jnp.float32)     # (C, TH,   W-1)

    # Lane-wise partial sums (reduce over channel / row axes only); the
    # cross-lane reduction to a scalar is deferred to the last H step.
    acc_h_ref[...] += jnp.sum(dh * dh, axis=(0, 1)).reshape(1, W)
    acc_w_ref[...] += jnp.sum(dw * dw, axis=(0, 1)).reshape(1, W - 1)

    # Vertical seam between this tile and the previous tile of the same batch.
    @pl.when(h_idx > 0)
    def _():
        ds = (x[:, 0, :] - carry_ref[...]).astype(jnp.float32)   # (C, W)
        acc_h_ref[...] += jnp.sum(ds * ds, axis=0).reshape(1, W)

    # Save this tile's last row for the next tile's seam term.
    carry_ref[...] = x[:, TH - 1, :]

    # Per-batch epilogue: one cross-lane reduction, write (1, 2) partials.
    @pl.when(h_idx == n_h - 1)
    def _():
        h_sum = jnp.sum(acc_h_ref[...])
        w_sum = jnp.sum(acc_w_ref[...])
        col = lax.broadcasted_iota(jnp.int32, (1, 2), 1)
        o_ref[...] = jnp.where(col == 0, h_sum, w_sum)


def _pick_tile_rows(C, H, W, itemsize, target_bytes=2 << 20):
    """Largest row tile TH with (TH == H) or (TH % 8 == 0 and TH | H),
    preferring input blocks <= target_bytes (keeps double-buffered VMEM small
    and generation-portable: v5e 16 MiB default scoped, v7x 64 MiB physical)."""
    if C * H * W * itemsize <= target_bytes:
        return H
    candidates = [th for th in range(8, H, 8) if H % th == 0]
    if not candidates:
        return H  # cannot tile legally; fall back to whole-image blocks
    fitting = [th for th in candidates if C * th * W * itemsize <= target_bytes]
    return max(fitting) if fitting else min(candidates)


def tv_loss(x, tv_loss_weight=1.0, tile_rows=None):
    """TV loss matching the PyTorch TVLoss.forward semantics. x is NCHW."""
    B, C, H, W = x.shape
    # NOTE: H == 1 or W == 1 gives count == 0 (div-by-zero), same as PyTorch.
    count_h = C * (H - 1) * W
    count_w = C * H * (W - 1)

    itemsize = jnp.dtype(x.dtype).itemsize
    if tile_rows is None:
        tile_rows = _pick_tile_rows(C, H, W, itemsize)
    assert H % tile_rows == 0 and (tile_rows == H or tile_rows % 8 == 0), (
        "tile_rows must divide H and be a multiple of 8 (or equal H)")
    n_h = H // tile_rows

    partials = pl.pallas_call(
        _tv_kernel,
        out_shape=jax.ShapeDtypeStruct((B, 1, 2), jnp.float32),
        grid_spec=pltpu.PrefetchScalarGridSpec(
            num_scalar_prefetch=0,
            grid=(B, n_h),
            in_specs=[
                pl.BlockSpec((None, C, tile_rows, W),
                             lambda b, h: (b, 0, h, 0)),
            ],
            out_specs=pl.BlockSpec((None, 1, 2), lambda b, h: (b, 0, 0)),
            scratch_shapes=[
                pltpu.VMEM((1, W), jnp.float32),               # acc_h (lane vec)
                pltpu.VMEM((1, max(W - 1, 1)), jnp.float32),   # acc_w (lane vec)
                pltpu.VMEM((C, W), x.dtype),                   # seam carry row
            ],
        ),
        compiler_params=pltpu.CompilerParams(
            dimension_semantics=("parallel", "arbitrary"),
            vmem_limit_bytes=32 * 1024 * 1024,
        ),
    )(x)

    # Final weighted combine in the wrapper (per-batch partials -> scalar).
    h_tv = jnp.sum(partials[:, 0, 0])
    w_tv = jnp.sum(partials[:, 0, 1])
    return (jnp.float32(tv_loss_weight) * 2.0
            * (h_tv / count_h + w_tv / count_w) / B)


def _tv_loss_ref(x, tv_loss_weight=1.0):
    B, C, H, W = x.shape
    count_h = C * (H - 1) * W
    count_w = C * H * (W - 1)
    h_tv = jnp.sum((x[:, :, 1:, :] - x[:, :, :-1, :]) ** 2)
    w_tv = jnp.sum((x[:, :, :, 1:] - x[:, :, :, :-1]) ** 2)
    return tv_loss_weight * 2.0 * (h_tv / count_h + w_tv / count_w) / B


if __name__ == "__main__":
    key = jax.random.PRNGKey(0)
    k1, k2 = jax.random.split(key)

    # Shapes consistent with the module's typical use: batch=2, channels=4, 16x16.
    x1 = jax.random.normal(k1, (2, 4, 16, 16), dtype=jnp.float32)
    out1 = jax.block_until_ready(tv_loss(x1, tv_loss_weight=1.0))
    ref1 = _tv_loss_ref(x1, tv_loss_weight=1.0)
    assert jnp.allclose(out1, ref1, rtol=1e-5, atol=1e-5), (out1, ref1)

    # Second check exercising the spatial H tiling (seam carry across tiles)
    # and the parallel batch axis.
    x2 = jax.random.normal(k2, (2, 3, 32, 16), dtype=jnp.float32)
    out2 = jax.block_until_ready(tv_loss(x2, tv_loss_weight=0.5, tile_rows=8))
    ref2 = _tv_loss_ref(x2, tv_loss_weight=0.5)
    assert jnp.allclose(out2, ref2, rtol=1e-5, atol=1e-5), (out2, ref2)

    print("KERNEL_OK")
</pallas_src>

<mosaic_0001>
module attributes {stable_mosaic.version = 11 : i64} {
  func.func @_tv_kernel(%arg0: i32, %arg1: i32, %arg2: memref<1x4x16x16xf32, #tpu.memory_space<vmem>>, %arg3: memref<1x1x2xf32, #tpu.memory_space<vmem>>, %arg4: memref<1x16xf32, #tpu.memory_space<vmem>>, %arg5: memref<1x15xf32, #tpu.memory_space<vmem>>, %arg6: memref<4x16xf32, #tpu.memory_space<vmem>>) attributes {dimension_semantics = [#tpu.dimension_semantics<parallel>, #tpu.dimension_semantics<arbitrary>], iteration_bounds = array<i64: 2, 1>, scalar_prefetch = 0 : i64, scratch_operands = 3 : i64, tpu.core_type = #tpu.core_type<tc>, window_params = [{transform_indices = @transform_0, window_bounds = array<i64: 1, 4, 16, 16>}, {transform_indices = @transform_1, window_bounds = array<i64: 1, 1, 2>}]} {
    %c0_i32 = arith.constant 0 : i32
    %0 = arith.cmpi eq, %arg1, %c0_i32 : i32
    %1 = arith.extui %0 : i1 to i32
    %c0_i32_0 = arith.constant 0 : i32
    %2 = arith.cmpi ne, %1, %c0_i32_0 : i32
    scf.if %2 {
      %cst_19 = arith.constant 0.000000e+00 : f32
      %32 = vector.broadcast %cst_19 : f32 to vector<1x16xf32>
      %c0_20 = arith.constant 0 : index
      %c0_21 = arith.constant 0 : index
      %33 = vector.load %arg4[%c0_20, %c0_21] : memref<1x16xf32, #tpu.memory_space<vmem>>, vector<1x16xf32>
      tpu.vector_store %arg4[%c0_20, %c0_21], %32 {strides = array<i32>} : memref<1x16xf32, #tpu.memory_space<vmem>>, vector<1x16xf32>,
      %cst_22 = arith.constant 0.000000e+00 : f32
      %34 = vector.broadcast %cst_22 : f32 to vector<1x15xf32>
      %c0_23 = arith.constant 0 : index
      %c0_24 = arith.constant 0 : index
      %35 = vector.load %arg5[%c0_23, %c0_24] : memref<1x15xf32, #tpu.memory_space<vmem>>, vector<1x15xf32>
      tpu.vector_store %arg5[%c0_23, %c0_24], %34 {strides = array<i32>} : memref<1x15xf32, #tpu.memory_space<vmem>>, vector<1x15xf32>,
    } else {
    }
    %c0 = arith.constant 0 : index
    %c0_1 = arith.constant 0 : index
    %c0_2 = arith.constant 0 : index
    %c0_3 = arith.constant 0 : index
    %3 = vector.load %arg2[%c0, %c0_1, %c0_2, %c0_3] : memref<1x4x16x16xf32, #tpu.memory_space<vmem>>, vector<1x4x16x16xf32>
    %4 = vector.shape_cast %3 : vector<1x4x16x16xf32> to vector<4x16x16xf32>
    %5 = vector.extract_strided_slice %4 {offsets = [0, 1, 0], sizes = [4, 15, 16], strides = [1, 1, 1]} : vector<4x16x16xf32> to vector<4x15x16xf32>
    %6 = vector.extract_strided_slice %4 {offsets = [0, 0, 0], sizes = [4, 15, 16], strides = [1, 1, 1]} : vector<4x16x16xf32> to vector<4x15x16xf32>
    %7 = arith.subf %5, %6 : vector<4x15x16xf32>
    %8 = vector.extract_strided_slice %4 {offsets = [0, 0, 1], sizes = [4, 16, 15], strides = [1, 1, 1]} : vector<4x16x16xf32> to vector<4x16x15xf32>
    %9 = vector.extract_strided_slice %4 {offsets = [0, 0, 0], sizes = [4, 16, 15], strides = [1, 1, 1]} : vector<4x16x16xf32> to vector<4x16x15xf32>
    %10 = arith.subf %8, %9 : vector<4x16x15xf32>
    %c0_4 = arith.constant 0 : index
    %c0_5 = arith.constant 0 : index
    %11 = vector.load %arg4[%c0_4, %c0_5] : memref<1x16xf32, #tpu.memory_space<vmem>>, vector<1x16xf32>
    %12 = arith.mulf %7, %7 : vector<4x15x16xf32>
    %cst = arith.constant dense<0.000000e+00> : vector<16xf32>
    %13 = vector.multi_reduction <add>, %12, %cst [0, 1] : vector<4x15x16xf32> to vector<16xf32>
    %14 = vector.shape_cast %13 : vector<16xf32> to vector<1x16xf32>
    %15 = arith.addf %11, %14 : vector<1x16xf32>
    %c0_6 = arith.constant 0 : index
    %c0_7 = arith.constant 0 : index
    %16 = vector.load %arg4[%c0_6, %c0_7] : memref<1x16xf32, #tpu.memory_space<vmem>>, vector<1x16xf32>
    tpu.vector_store %arg4[%c0_6, %c0_7], %15 {strides = array<i32>} : memref<1x16xf32, #tpu.memory_space<vmem>>, vector<1x16xf32>,
    %c0_8 = arith.constant 0 : index
    %c0_9 = arith.constant 0 : index
    %17 = vector.load %arg5[%c0_8, %c0_9] : memref<1x15xf32, #tpu.memory_space<vmem>>, vector<1x15xf32>
    %18 = arith.mulf %10, %10 : vector<4x16x15xf32>
    %cst_10 = arith.constant dense<0.000000e+00> : vector<15xf32>
    %19 = vector.multi_reduction <add>, %18, %cst_10 [0, 1] : vector<4x16x15xf32> to vector<15xf32>
    %20 = vector.shape_cast %19 : vector<15xf32> to vector<1x15xf32>
    %21 = arith.addf %17, %20 : vector<1x15xf32>
    %c0_11 = arith.constant 0 : index
    %c0_12 = arith.constant 0 : index
    %22 = vector.load %arg5[%c0_11, %c0_12] : memref<1x15xf32, #tpu.memory_space<vmem>>, vector<1x15xf32>
    tpu.vector_store %arg5[%c0_11, %c0_12], %21 {strides = array<i32>} : memref<1x15xf32, #tpu.memory_space<vmem>>, vector<1x15xf32>,
    %c0_i32_13 = arith.constant 0 : i32
    %23 = arith.cmpi sgt, %arg1, %c0_i32_13 : i32
    %24 = arith.extui %23 : i1 to i32
    %c0_i32_14 = arith.constant 0 : i32
    %25 = arith.cmpi ne, %24, %c0_i32_14 : i32
    scf.if %25 {
      %32 = vector.extract_strided_slice %4 {offsets = [0, 0, 0], sizes = [4, 1, 16], strides = [1, 1, 1]} : vector<4x16x16xf32> to vector<4x1x16xf32>
      %33 = vector.shape_cast %32 : vector<4x1x16xf32> to vector<4x16xf32>
      %c0_19 = arith.constant 0 : index
      %c0_20 = arith.constant 0 : index
      %34 = vector.load %arg6[%c0_19, %c0_20] : memref<4x16xf32, #tpu.memory_space<vmem>>, vector<4x16xf32>
      %35 = arith.subf %33, %34 : vector<4x16xf32>
      %c0_21 = arith.constant 0 : index
      %c0_22 = arith.constant 0 : index
      %36 = vector.load %arg4[%c0_21, %c0_22] : memref<1x16xf32, #tpu.memory_space<vmem>>, vector<1x16xf32>
      %37 = arith.mulf %35, %35 : vector<4x16xf32>
      %cst_23 = arith.constant dense<0.000000e+00> : vector<16xf32>
      %38 = vector.multi_reduction <add>, %37, %cst_23 [0] : vector<4x16xf32> to vector<16xf32>
      %39 = vector.shape_cast %38 : vector<16xf32> to vector<1x16xf32>
      %40 = arith.addf %36, %39 : vector<1x16xf32>
      %c0_24 = arith.constant 0 : index
      %c0_25 = arith.constant 0 : index
      %41 = vector.load %arg4[%c0_24, %c0_25] : memref<1x16xf32, #tpu.memory_space<vmem>>, vector<1x16xf32>
      tpu.vector_store %arg4[%c0_24, %c0_25], %40 {strides = array<i32>} : memref<1x16xf32, #tpu.memory_space<vmem>>, vector<1x16xf32>,
    } else {
    }
    %26 = vector.extract_strided_slice %4 {offsets = [0, 15, 0], sizes = [4, 1, 16], strides = [1, 1, 1]} : vector<4x16x16xf32> to vector<4x1x16xf32>
    %27 = vector.shape_cast %26 : vector<4x1x16xf32> to vector<4x16xf32>
    %c0_15 = arith.constant 0 : index
    %c0_16 = arith.constant 0 : index
    %28 = vector.load %arg6[%c0_15, %c0_16] : memref<4x16xf32, #tpu.memory_space<vmem>>, vector<4x16xf32>
    tpu.vector_store %arg6[%c0_15, %c0_16], %27 {strides = array<i32>} : memref<4x16xf32, #tpu.memory_space<vmem>>, vector<4x16xf32>,
    %c0_i32_17 = arith.constant 0 : i32
    %29 = arith.cmpi eq, %arg1, %c0_i32_17 : i32
    %30 = arith.extui %29 : i1 to i32
    %c0_i32_18 = arith.constant 0 : i32
    %31 = arith.cmpi ne, %30, %c0_i32_18 : i32
    scf.if %31 {
      %c0_19 = arith.constant 0 : index
      %c0_20 = arith.constant 0 : index
      %32 = vector.load %arg4[%c0_19, %c0_20] : memref<1x16xf32, #tpu.memory_space<vmem>>, vector<1x16xf32>
      %33 = vector.shape_cast %32 : vector<1x16xf32> to vector<1x1x16xf32>
      %cst_21 = arith.constant dense<0.000000e+00> : vector<1xf32>
      %34 = vector.multi_reduction <add>, %33, %cst_21 [1, 2] : vector<1x1x16xf32> to vector<1xf32>
      %35 = vector.shape_cast %34 : vector<1xf32> to vector<1x1x1xf32>
      %36 = vector.extract %35[0, 0, 0] : f32 from vector<1x1x1xf32>
      %c0_22 = arith.constant 0 : index
      %c0_23 = arith.constant 0 : index
      %37 = vector.load %arg5[%c0_22, %c0_23] : memref<1x15xf32, #tpu.memory_space<vmem>>, vector<1x15xf32>
      %38 = vector.shape_cast %37 : vector<1x15xf32> to vector<1x1x15xf32>
      %cst_24 = arith.constant dense<0.000000e+00> : vector<1xf32>
      %39 = vector.multi_reduction <add>, %38, %cst_24 [1, 2] : vector<1x1x15xf32> to vector<1xf32>
      %40 = vector.shape_cast %39 : vector<1xf32> to vector<1x1x1xf32>
      %41 = vector.extract %40[0, 0, 0] : f32 from vector<1x1x1xf32>
      %42 = tpu.iota {dimensions = array<i32: 1>} : vector<1x2xi32>
      %c0_i32_25 = arith.constant 0 : i32
      %43 = vector.broadcast %c0_i32_25 : i32 to vector<1x2xi32>
      %44 = arith.cmpi eq, %42, %43 : vector<1x2xi32>
      %45 = vector.broadcast %36 : f32 to vector<1x2xf32>
      %46 = vector.broadcast %41 : f32 to vector<1x2xf32>
      %47 = arith.select %44, %45, %46 : vector<1x2xi1>, vector<1x2xf32>
      %c0_26 = arith.constant 0 : index
      %c0_27 = arith.constant 0 : index
      %c0_28 = arith.constant 0 : index
      %48 = vector.load %arg3[%c0_26, %c0_27, %c0_28] : memref<1x1x2xf32, #tpu.memory_space<vmem>>, vector<1x1x2xf32>
      %49 = vector.shape_cast %48 : vector<1x1x2xf32> to vector<1x2xf32>
      %50 = vector.shape_cast %47 : vector<1x2xf32> to vector<1x1x2xf32>
      tpu.vector_store %arg3[%c0_26, %c0_27, %c0_28], %50 {strides = array<i32>} : memref<1x1x2xf32, #tpu.memory_space<vmem>>, vector<1x1x2xf32>,
    } else {
    }
    return
  }
  func.func @transform_0(%arg0: i32, %arg1: i32) -> (i32, i32, i32, i32) {
    %c0_i32 = arith.constant 0 : i32
    %c0_i32_0 = arith.constant 0 : i32
    %c0_i32_1 = arith.constant 0 : i32
    return %arg0, %c0_i32, %arg1, %c0_i32_0 : i32, i32, i32, i32
  }
  func.func @transform_1(%arg0: i32, %arg1: i32) -> (i32, i32, i32) {
    %c0_i32 = arith.constant 0 : i32
    %c0_i32_0 = arith.constant 0 : i32
    %c0_i32_1 = arith.constant 0 : i32
    return %arg0, %c0_i32, %c0_i32_0 : i32, i32, i32
  }
}

</mosaic_0001>

<llo_original>
// kernel: tpu_custom_call.1
$region0: #{tpu_custom_call.1}
  #allocation0 [shape = 'u32[]', space=smem, size = 0x4, offset = 0x4, fixed_abs, tag = 'smem constant byte address 0x4 - core index']
  #allocation1 [shape = 'u32[144,128]{1,0:T(1,128)}', space=vmem, size = 0x12000, scoped, tag = 'internal scratch']
  #allocation2 [shape = 'f32[1,16]{1,0:T(1,128)}', space=vmem, size = 0x200, scoped, tag = 'scratch operand']
  #allocation3 [shape = 'f32[1,15]{1,0:T(1,128)}', space=vmem, size = 0x200, scoped, tag = 'scratch operand']
  #allocation4 [shape = 'f32[4,16]{1,0:T(4,128)}', space=vmem, size = 0x800, scoped, tag = 'scratch operand']
  %s0 = inlined_call_operand.hbm [shape: f32[2,4,16,16], index: 0, kind: input, shape index: {}]
  %s1 = inlined_call_operand.hbm [shape: f32[2,1,2], index: 1, kind: output, shape index: {}]
  %s2 = sld [smem:[#allocation0]]
  $region53: #{tpu_custom_call.1} parent=0
    _
  %s4 = ssub.s32 1, %s2
  %s5 = scalar_select 0, %s4, %s2
  $region1: #{tpu_custom_call.1} parent=0
    #allocation5 [shape = 'u8[65536]{0}', space=vmem, size = 0x10000, scoped, tag = 'input window, operand 0']
    #allocation6 [shape = 's32[2]{0}', space=sflag, size = 0x8, scoped, tag = 'scoped memory for tpu_custom_call.1']
    #allocation7 [shape = 's32[2]{0}', space=sflag, size = 0x8, scoped, tag = 'scoped memory for tpu_custom_call.1']
    #allocation8 [shape = 'u8[1024]{0}', space=vmem, size = 0x400, scoped, tag = 'output window, operand 0']
    %6 = vsyncpa [#allocation6], 0
    %s7 = scalar_lea.sflag [#allocation6], 1
    %8 = vsyncpa %s7, 0
    %9 = vsyncpa [#allocation7], 0
    %s10 = scalar_lea.sflag [#allocation7], 1
    %11 = vsyncpa %s10, 0
    loop: start=0, step=1, limit=4
    $region2: #{tpu_custom_call.1} parent=1 // loop_pre_header
      _
    $region3: #{tpu_custom_call.1} parent=1 // loop_header
      %s13 = sphi 0, %s17
      %p14 = scmp.ge.s32.totalorder %s13, 4
      %s20 = sphi 0, %s32
      %s21 = sphi 0, %s28
      %s22 = sphi 0, %s20
      %s23 = sphi 0, %s21
      %s24 = sphi 0, %s22
      %s25 = sphi 0, %s23
      %s37 = sphi 0, %s39
      %s40 = sphi 0, %s37
      %s41 = sphi 0, %s40
      %s57 = sphi 0, %s41
      %s63 = sphi 0, %s65
      %s66 = sphi 0, %s63
      %s67 = sphi 0, %s66
      %s83 = sphi 0, %s67
    $region4: #{tpu_custom_call.1} parent=1 // loop_header_branch
      %16 = sbr.rel (%p14) target = $region8
    $region5: #{tpu_custom_call.1} parent=1 // loop_body
      %s18 = ssub.s32 %s13, 1
      %s19 = ssub.s32 %s13, 2
      %s26 = sadd.s32 1, %s21
      %p27 = scmp.ge.s32.totalorder %s26, 1
      %s28 = scalar_select %p27, 0, %s26
      %s29 = sadd.s32 1, %s20
      %s30 = scalar_select %p27, %s29, %s20
      %p31 = scmp.ge.s32.totalorder %s30, 2
      %s32 = scalar_select %p31, 0, %s30
      %s33 = ssub.s32 %s20, %s32
      %s34 = ssub.s32 %s21, %s28
      %s35 = sor.u32 %s33, %s34
      %p36 = scmp.eq.s32.totalorder %s35, 0
      %s38 = sadd.s32 %s37, 1
      %s39 = scalar_select %p36, %s37, %s38
      %p42 = pneg %p36
      %p43 = scmp.eq.s32.totalorder %s13, 1
      %p44 = por %p42, %p43
      %p45 = scmp.ne.s32.totalorder %s37, %s40
      %p46 = scmp.eq.s32.totalorder %s13, 0
      %p47 = por %p45, %p46
      %p48 = scmp.ne.s32.totalorder %s37, %s40
      %p49 = scmp.eq.s32.totalorder %s18, 1
      %p50 = por %p48, %p49
      %p51 = scmp.ne.s32.totalorder %s40, %s41
      %p52 = scmp.eq.s32.totalorder %s18, 0
      %p53 = por %p51, %p52
      %p54 = scmp.ne.s32.totalorder %s40, %s41
      %p55 = scmp.eq.s32.totalorder %s19, 1
      %p56 = por %p54, %p55
      %p58 = scmp.ne.s32.totalorder %s41, %s57
      %p59 = scmp.eq.s32.totalorder %s19, 0
      %p60 = por %p58, %p59
      %s61 = ssub.s32 %s20, %s32
      %p62 = scmp.eq.s32.totalorder %s61, 0
      %s64 = sadd.s32 %s63, 1
      %s65 = scalar_select %p62, %s63, %s64
      %p68 = pneg %p62
      %p69 = scmp.eq.s32.totalorder %s13, 1
      %p70 = por %p68, %p69
      %p71 = scmp.ne.s32.totalorder %s63, %s66
      %p72 = scmp.eq.s32.totalorder %s13, 0
      %p73 = por %p71, %p72
      %p74 = scmp.ne.s32.totalorder %s63, %s66
      %p75 = scmp.eq.s32.totalorder %s18, 1
      %p76 = por %p74, %p75
      %p77 = scmp.ne.s32.totalorder %s66, %s67
      %p78 = scmp.eq.s32.totalorder %s18, 0
      %p79 = por %p77, %p78
      %p80 = scmp.ne.s32.totalorder %s66, %s67
      %p81 = scmp.eq.s32.totalorder %s19, 1
      %p82 = por %p80, %p81
      %p84 = scmp.ne.s32.totalorder %s67, %s83
      %p85 = scmp.eq.s32.totalorder %s19, 0
      %p86 = por %p84, %p85
      %p87 = scmp.le.s32.totalorder 1, %s13
      %p88 = scmp.lt.s32.totalorder %s13, 3
      %p89 = pnand %p87, %p88
      %p90 = pneg %p89
      // Predicated region
      $region9: #{tpu_custom_call.1} parent=5 // pred_check
        _
      $region10: #{tpu_custom_call.1} parent=5 // pred_check_branch
        %92 = sbr.rel (%p89) target = $region12
      $region11: #{tpu_custom_call.1} parent=5 // pred_region
        %s93 = ssub.s32 %s13, 1
      $region12: #{tpu_custom_call.1} parent=5 // pred_fallthru
        _
      %p94 = scmp.lt.s32.totalorder %s13, 2
      // Predicated region
      $region13: #{tpu_custom_call.1} parent=5 // pred_check
        %p95 = pneg %p94
      $region14: #{tpu_custom_call.1} parent=5 // pred_check_branch
        %97 = sbr.rel (%p95) target = $region16
      $region15: #{tpu_custom_call.1} parent=5 // pred_region
        // Predicated region
        $region17: #{tpu_custom_call.1} parent=15 // pred_check
          %p98 = pneg %p47
        $region18: #{tpu_custom_call.1} parent=15 // pred_check_branch
          %100 = sbr.rel (%p98) target = $region20
        $region19: #{tpu_custom_call.1} parent=15 // pred_region
          %s101 = sand.u32 %s37, 1
          %s102 = scalar_lea.sflag [#allocation6], %s101
          %s103 = sand.u32 %s37, 1
          %s104 = smul.addr %s103, 64
          %s105 = scalar_lea.vmem [#allocation5], %s104
          %s106 = smul.u32 2, %s21
          %s108 = ssub.s32 1024, 1024
          %109 = vsyncadd %s102, %s108
          %s110 = smul.addr %s20, 8
          %s111 = sadd.s32 %s106, %s110
          %s112 = smul.addr %s111, 128
          %s113 = scalar_lea.hbm %s0, %s112
          %s114 = sshll.u32 %s105, 4
          %s115 = int_to_ptr.vmem [resolvable:$true] %s114
          %120 = dma.hbm_to_vmem [thread:$0]  %s113, 1024, %s115, %s102, 128, 128, 8
        $region20: #{tpu_custom_call.1} parent=15 // pred_fallthru
          _
      $region16: #{tpu_custom_call.1} parent=5 // pred_fallthru
        _
      %p121 = scmp.le.s32.totalorder 1, %s13
      %p122 = scmp.lt.s32.totalorder %s13, 3
      %p123 = pnand %p121, %p122
      %p124 = pneg %p123
      // Predicated region
      $region21: #{tpu_custom_call.1} parent=5 // pred_check
        _
      $region22: #{tpu_custom_call.1} parent=5 // pred_check_branch
        %126 = sbr.rel (%p123) target = $region24
      $region23: #{tpu_custom_call.1} parent=5 // pred_region
        %s127 = ssub.s32 %s13, 1
        %s128 = sand.u32 %s40, 1
        %s129 = scalar_lea.sflag [#allocation6], %s128
        %s130 = sand.u32 %s40, 1
        %s131 = smul.addr %s130, 64
        %s132 = scalar_lea.vmem [#allocation5], %s131
        // Predicated region
        $region25: #{tpu_custom_call.1} parent=23 // pred_check
          %p133 = pneg %p53
        $region26: #{tpu_custom_call.1} parent=23 // pred_check_branch
          %135 = sbr.rel (%p133) target = $region28
        $region27: #{tpu_custom_call.1} parent=23 // pred_region
          %136 = dma.done %s129, 1024
        $region28: #{tpu_custom_call.1} parent=23 // pred_fallthru
          _
        %s137 = sand.u32 %s40, 1
        %s138 = scalar_lea.sflag [#allocation6], %s137
        %s139 = sand.u32 %s40, 1
        %s140 = smul.addr %s139, 64
        %s141 = scalar_lea.vmem [#allocation5], %s140
        %p142 = pneg %p53
        %p143 = pneg %p50
        %p144 = pneg %p79
        %p145 = pneg %p76
        %s146 = sand.u32 %s66, 1
        %s147 = scalar_lea.sflag [#allocation7], %s146
        %s148 = sand.u32 %s66, 1
        %s149 = scalar_lea.vmem [#allocation8], %s148
        %s150 = smul.u32 2, %s23
        %p151 = scmp.eq.s32.totalorder %s23, 0
        // Predicated region
        $region29: #{tpu_custom_call.1} parent=23 // pred_check
          %p152 = pneg %p151
        $region30: #{tpu_custom_call.1} parent=23 // pred_check_branch
          %154 = sbr.rel (%p152) target = $region32
        $region31: #{tpu_custom_call.1} parent=23 // pred_region
          %vm155 = vcmask 122880
          %156 = vst.msk [vmem:[#allocation2] sm:$0x1] %vm155, 0.0
          %vm157 = vcmask 114688
          %158 = vst.msk [vmem:[#allocation3] sm:$0x1] %vm157, 0.0
        $region32: #{tpu_custom_call.1} parent=23 // pred_fallthru
          _
        %v159 = vld [vmem:[%s132] sm:$0xff]
        %v160 = vld [vmem:[%s132 + $0x8] sm:$0xff]
        %v161 = vld [vmem:[%s132 + $0x10] sm:$0xff]
        %v162 = vld [vmem:[%s132 + $0x18] sm:$0xff]
        %v163 = vld [vmem:[%s132 + $0x20] sm:$0xff]
        %v164 = vld [vmem:[%s132 + $0x28] sm:$0xff]
        %v165 = vld [vmem:[%s132 + $0x30] sm:$0xff]
        %v166 = vld [vmem:[%s132 + $0x38] sm:$0xff]
        %vm175 = vcmask 1040384
        %v176 = vrot.slane %v159, 7
        %v177 = vrot.slane %v160, 7
        %v178 = vsel %vm175, %v176, %v177
        %v179 = vrot.slane %v161, 7
        %v180 = vrot.slane %v162, 7
        %v181 = vsel %vm175, %v179, %v180
        %v182 = vrot.slane %v163, 7
        %v183 = vrot.slane %v164, 7
        %v184 = vsel %vm175, %v182, %v183
        %v185 = vrot.slane %v165, 7
        %v186 = vrot.slane %v166, 7
        %v187 = vsel %vm175, %v185, %v186
        %v196 = vsub.f32 %v159, %v176
        %v197 = vsub.f32 %v160, %v178
        %v198 = vsub.f32 %v161, %v179
        %v199 = vsub.f32 %v162, %v181
        %v200 = vsub.f32 %v163, %v182
        %v201 = vsub.f32 %v164, %v184
        %v202 = vsub.f32 %v165, %v185
        %v203 = vsub.f32 %v166, %v187
        %204 = vrot.lane.b32.xlu0 %v159, 1
        %v205 = vpop.permute.xlu0 %204
        %206 = vrot.lane.b32.xlu0 %v160, 1
        %v207 = vpop.permute.xlu0 %206
        %208 = vrot.lane.b32.xlu0 %v161, 1
        %v209 = vpop.permute.xlu0 %208
        %210 = vrot.lane.b32.xlu0 %v162, 1
        %v211 = vpop.permute.xlu0 %210
        %212 = vrot.lane.b32.xlu0 %v163, 1
        %v213 = vpop.permute.xlu0 %212
        %214 = vrot.lane.b32.xlu0 %v164, 1
        %v215 = vpop.permute.xlu0 %214
        %216 = vrot.lane.b32.xlu0 %v165, 1
        %v217 = vpop.permute.xlu0 %216
        %218 = vrot.lane.b32.xlu0 %v166, 1
        %v219 = vpop.permute.xlu0 %218
        %v228 = vsub.f32 %v159, %v205
        %v229 = vsub.f32 %v160, %v207
        %v230 = vsub.f32 %v161, %v209
        %v231 = vsub.f32 %v162, %v211
        %v232 = vsub.f32 %v163, %v213
        %v233 = vsub.f32 %v164, %v215
        %v234 = vsub.f32 %v165, %v217
        %v235 = vsub.f32 %v166, %v219
        %v236 = vld [vmem:[#allocation2] sm:$0x1]
        %v237 = vmul.f32 %v196, %v196
        %v238 = vmul.f32 %v197, %v197
        %v239 = vmul.f32 %v198, %v198
        %v240 = vmul.f32 %v199, %v199
        %v241 = vmul.f32 %v200, %v200
        %v242 = vmul.f32 %v201, %v201
        %v243 = vmul.f32 %v202, %v202
        %v244 = vmul.f32 %v203, %v203
        %vm253 = vcmask 1046528
        %v254 = vrot.slane %v237, 1
        %v255 = vrot.slane %v238, 1
        %v256 = vsel %vm253, %v254, %v255
        %v257 = vrot.slane %v239, 1
        %v258 = vrot.slane %v240, 1
        %v259 = vsel %vm253, %v257, %v258
        %v260 = vrot.slane %v241, 1
        %v261 = vrot.slane %v242, 1
        %v262 = vsel %vm253, %v260, %v261
        %v263 = vrot.slane %v243, 1
        %v264 = vrot.slane %v244, 1
        %v265 = vsel %vm253, %v263, %v264
        %vm274 = vcmask 130048
        %v275 = vsel %vm274, %v256, 0.0
        %vm276 = vcmask 129024
        %v277 = vsel %vm276, %v255, 0.0
        %v278 = vadd.f32 %v275, %v277
        %v279 = vsel %vm274, %v259, 0.0
        %v280 = vadd.f32 %v278, %v279
        %v281 = vsel %vm276, %v258, 0.0
        %v282 = vadd.f32 %v280, %v281
        %v283 = vsel %vm274, %v262, 0.0
        %v284 = vadd.f32 %v282, %v283
        %v285 = vsel %vm276, %v261, 0.0
        %v286 = vadd.f32 %v284, %v285
        %v287 = vsel %vm274, %v265, 0.0
        %v288 = vadd.f32 %v286, %v287
        %v289 = vsel %vm276, %v264, 0.0
        %v290 = vadd.f32 %v288, %v289
        %v291 = vrot.slane %v290, 4
        %v292 = vadd.f32 %v290, %v291
        %v293 = vrot.slane %v292, 2
        %v294 = vadd.f32 %v292, %v293
        %v295 = vrot.slane %v294, 1
        %v296 = vadd.f32 %v294, %v295
        %v297 = vadd.f32 %v236, %v296
        %vm298 = vcmask 122880
        %299 = vst.msk [vmem:[#allocation2] sm:$0x1] %vm298, %v297
        %v300 = vld [vmem:[#allocation3] sm:$0x1]
        %v301 = vmul.f32 %v228, %v228
        %v302 = vmul.f32 %v229, %v229
        %v303 = vmul.f32 %v230, %v230
        %v304 = vmul.f32 %v231, %v231
        %v305 = vmul.f32 %v232, %v232
        %v306 = vmul.f32 %v233, %v233
        %v307 = vmul.f32 %v234, %v234
        %v308 = vmul.f32 %v235, %v235
        %vm309 = vcmask 130056
        %v310 = vsel %vm309, %v301, 0.0
        %v311 = vsel %vm309, %v302, 0.0
        %v312 = vadd.f32 %v310, %v311
        %v313 = vsel %vm309, %v303, 0.0
        %v314 = vadd.f32 %v312, %v313
        %v315 = vsel %vm309, %v304, 0.0
        %v316 = vadd.f32 %v314, %v315
        %v317 = vsel %vm309, %v305, 0.0
        %v318 = vadd.f32 %v316, %v317
        %v319 = vsel %vm309, %v306, 0.0
        %v320 = vadd.f32 %v318, %v319
        %v321 = vsel %vm309, %v307, 0.0
        %v322 = vadd.f32 %v320, %v321
        %v323 = vsel %vm309, %v308, 0.0
        %v324 = vadd.f32 %v322, %v323
        %v325 = vrot.slane %v324, 4
        %v326 = vadd.f32 %v324, %v325
        %v327 = vrot.slane %v326, 2
        %v328 = vadd.f32 %v326, %v327
        %v329 = vrot.slane %v328, 1
        %v330 = vadd.f32 %v328, %v329
        %v333 = vunpack.c.l.s4 1966171168
        %v334 = vunpack.c.0.s8 %v333
        %v335 = vlaneseq
        %v336 = vshrl.u32 %v335, 7
        %v337 = vsub.s32 %v334, %v336
        %v338 = vrot.slane %v330, %v337
        %v340 = vunpack.c.l.s4 1966171168
        %v341 = vunpack.c.0.s8 %v340
        %v342 = vlaneseq
        %v343 = vshrl.u32 %v342, 7
        %v344 = vsub.s32 %v341, %v343
        %v345 = vrot.slane %v338, %v344
        %346 = vrot.lane.b32.xlu0 %v345, 127
        %v347 = vpop.permute.xlu0 %346
        %v349 = vadd.f32 %v300, %v347
        %vm350 = vcmask 114688
        %351 = vst.msk [vmem:[#allocation3] sm:$0x1] %vm350, %v349
        %p352 = scmp.gt.s32.totalorder %s23, 0
        // Predicated region
        $region33: #{tpu_custom_call.1} parent=23 // pred_check
          %p353 = pneg %p352
        $region34: #{tpu_custom_call.1} parent=23 // pred_check_branch
          %355 = sbr.rel (%p353) target = $region36
        $region35: #{tpu_custom_call.1} parent=23 // pred_region
          %v356 = vld [vmem:[#allocation4] sm:$0xf]
          %v358 = vrot.slane %v356, 1
          %v359 = vrot.slane %v356, 2
          %v360 = vrot.slane %v356, 3
          %v365 = vsub.f32 %v159, %v356
          %v366 = vsub.f32 %v161, %v358
          %v367 = vsub.f32 %v163, %v359
          %v368 = vsub.f32 %v165, %v360
          %v369 = vld [vmem:[#allocation2] sm:$0x1]
          %v370 = vmul.f32 %v365, %v365
          %v371 = vmul.f32 %v366, %v366
          %v372 = vmul.f32 %v367, %v367
          %v373 = vmul.f32 %v368, %v368
          %v378 = vrot.slane %v371, 7
          %vm379 = vcmask 1041409
          %v380 = vsel %vm379, %v378, %v370
          %v381 = vrot.slane %v372, 6
          %vm382 = vcmask 1042434
          %v383 = vsel %vm382, %v381, %v380
          %v384 = vrot.slane %v373, 5
          %vm385 = vcmask 1043459
          %v386 = vsel %vm385, %v384, %v383
          %vm388 = vcmask 125952
          %v389 = vsel %vm388, %v386, 0.0
          %v390 = vrot.slane %v389, 4
          %v391 = vadd.f32 %v389, %v390
          %v392 = vrot.slane %v391, 2
          %v393 = vadd.f32 %v391, %v392
          %v394 = vrot.slane %v393, 1
          %v395 = vadd.f32 %v393, %v394
          %v396 = vadd.f32 %v369, %v395
          %397 = vst.msk [vmem:[#allocation2] sm:$0x1] %vm298, %v396
        $region36: #{tpu_custom_call.1} parent=23 // pred_fallthru
          _
        %v398 = vrot.slane %v164, 6
        %vm399 = vcmask 1041409
        %v400 = vsel %vm399, %v398, %v180
        %v401 = vrot.slane %v166, 5
        %vm402 = vcmask 1042434
        %v403 = vsel %vm402, %v401, %v400
        %vm406 = vcmask 130055
        %407 = vst.msk [vmem:[#allocation4 - $0x7] sm:$0x80] %vm406, %v160
        %vm408 = vcmask 124928
        %409 = vst.msk [vmem:[#allocation4 + $0x1] sm:$0x7] %vm408, %v403
        // Predicated region
        $region37: #{tpu_custom_call.1} parent=23 // pred_check
          %p410 = pneg %p151
        $region38: #{tpu_custom_call.1} parent=23 // pred_check_branch
          %412 = sbr.rel (%p410) target = $region40
        $region39: #{tpu_custom_call.1} parent=23 // pred_region
          %v413 = vld [vmem:[#allocation2] sm:$0x1]
          %v414 = vsel %vm298, %v413, 0.0
          %415 = vadd.xlane.f32.xlu0 %v414
          %v416 = vpop.xlane.xlu0 %415
          %v417 = vrot.slane %v416, 4
          %v418 = vadd.f32 %v416, %v417
          %v419 = vrot.slane %v418, 2
          %v420 = vadd.f32 %v418, %v419
          %v421 = vrot.slane %v420, 1
          %v422 = vadd.f32 %v420, %v421
          %s423 = vtos %v422
          %v424 = vld [vmem:[#allocation3] sm:$0x1]
          %v425 = vsel %vm350, %v424, 0.0
          %426 = vadd.xlane.f32.xlu0 %v425
          %v427 = vpop.xlane.xlu0 %426
          %v428 = vrot.slane %v427, 4
          %v429 = vadd.f32 %v427, %v428
          %v430 = vrot.slane %v429, 2
          %v431 = vadd.f32 %v429, %v430
          %v432 = vrot.slane %v431, 1
          %v433 = vadd.f32 %v431, %v432
          %s434 = vtos %v433
          %v435 = vlaneseq
          %v436 = vand.u32 %v435, 127
          %vm437 = vcmp.eq.s32.totalorder %v436, 0
          %v438 = vstv %s423
          %v439 = vstv %s434
          %v440 = vsel %vm437, %v438, %v439
          %vm441 = vcmask 8192
          %442 = vst.msk [vmem:[%s149] sm:$0x1] %vm441, %v440
        $region40: #{tpu_custom_call.1} parent=23 // pred_fallthru
          _
        %s443 = sand.u32 %s66, 1
        %s444 = scalar_lea.sflag [#allocation7], %s443
        %s445 = sand.u32 %s66, 1
        %s446 = scalar_lea.vmem [#allocation8], %s445
        // Predicated region
        $region41: #{tpu_custom_call.1} parent=23 // pred_check
          %p447 = pneg %p76
        $region42: #{tpu_custom_call.1} parent=23 // pred_check_branch
          %449 = sbr.rel (%p447) target = $region44
        $region43: #{tpu_custom_call.1} parent=23 // pred_region
          %s451 = ssub.s32 16, 16
          %452 = vsyncadd %s444, %s451
          %s453 = smul.addr %s22, 16
          %s454 = scalar_lea.hbm %s1, %s453
          %s456 = sshll.u32 %s446, 4
          %s457 = int_to_ptr.vmem [resolvable:$true] %s456
          %459 = dma.vmem_to_hbm [thread:$0]  %s457, 16, %s454, %s444
        $region44: #{tpu_custom_call.1} parent=23 // pred_fallthru
          _
      $region24: #{tpu_custom_call.1} parent=5 // pred_fallthru
        _
      %p460 = scmp.le.s32.totalorder 2, %s13
      // Predicated region
      $region45: #{tpu_custom_call.1} parent=5 // pred_check
        %p461 = pneg %p460
      $region46: #{tpu_custom_call.1} parent=5 // pred_check_branch
        %463 = sbr.rel (%p461) target = $region48
      $region47: #{tpu_custom_call.1} parent=5 // pred_region
        %s464 = ssub.s32 %s13, 2
        // Predicated region
        $region49: #{tpu_custom_call.1} parent=47 // pred_check
          %p465 = pneg %p82
        $region50: #{tpu_custom_call.1} parent=47 // pred_check_branch
          %467 = sbr.rel (%p465) target = $region52
        $region51: #{tpu_custom_call.1} parent=47 // pred_region
          %s468 = sand.u32 %s67, 1
          %s469 = scalar_lea.sflag [#allocation7], %s468
          %s470 = sand.u32 %s67, 1
          %s471 = scalar_lea.vmem [#allocation8], %s470
          %472 = dma.done %s469, 16
        $region52: #{tpu_custom_call.1} parent=47 // pred_fallthru
          _
      $region48: #{tpu_custom_call.1} parent=5 // pred_fallthru
        _
    $region6: #{tpu_custom_call.1} parent=1 // loop_footer
      %s17 = sadd.s32 1, %s13
    $region7: #{tpu_custom_call.1} parent=1 // loop_footer_branch
      %12 = sbr.rel target = $region3
    $region8: #{tpu_custom_call.1} parent=1 // loop_exit
      _
    %473 = vsyncpa [#allocation6], 1
    %s474 = scalar_lea.sflag [#allocation6], 1
    %475 = vsyncpa %s474, 1
    %476 = vsyncpa [#allocation7], 1
    %s477 = scalar_lea.sflag [#allocation7], 1
    %478 = vsyncpa %s477, 1

</llo_original>
